<compile_context>
chip_gen: v7x
topology: tpu7x:2x2x1
jax: 0.10.0
libtpu: 0.0.40
codegen_flags: <defaults>
</compile_context>

<pallas_src>
import jax
import jax.numpy as jnp
from jax import lax
from jax.experimental import pallas as pl
from jax.experimental.pallas import tpu as pltpu


# ----------------------------- Pallas kernel ------------------------------ #

def _loss_partial_kernel(pred_ref, gt_ref, phalo_ref, ghalo_ref, out_ref,
                         gt_grad_ref):
    """One (C, TH, W) prediction tile vs. the matching ground-truth tile.

    Writes a (1, W) f32 partial sum:
        out[0, w] = sum_{c, th} (p - t)^2 + |grad(p) - grad(t)|
    grad is the zero-padded L1 tensor gradient of the *full* image; the image
    row just above this tile arrives via the halo refs (zeros for the top
    tile).  grad(t) is cached in VMEM scratch at i == 0 and reused for i > 0
    (the ground-truth block is identical for every prediction slice i).
    """
    C, TH, W = pred_ref.shape
    i = pl.program_id(2)          # innermost ("arbitrary") prediction-slice axis

    # Boundary masks hoisted once per grid step, shared by every gradient call
    # (JAX does not CSE iota/broadcast, so build them exactly once).
    col = lax.broadcasted_iota(jnp.int32, (TH, W), 1)
    row = lax.broadcasted_iota(jnp.int32, (TH, W), 0)
    left_exists = col != 0        # j > 0  -> x[., j-1] is inside the image
    is_top_row = row == 0         # tile-local row 0 -> neighbor is the halo row
    # TODO(synk): for W < 128, fold row-chunks into the lane axis (free
    # row-major reshape) for lane-dense vregs/stores; left as layout plumbing.

    def grad2d(x, up_halo):
        # TensorGradient(L1=True): |x[i,j-1]-x[i,j]| + |x[i-1,j]-x[i,j]|,
        # zero padding outside the image (roll wraparound masked off).
        left = jnp.where(left_exists, pltpu.roll(x, shift=1, axis=1), 0.0)
        up = jnp.where(is_top_row, up_halo, pltpu.roll(x, shift=1, axis=0))
        return jnp.abs(left - x) + jnp.abs(up - x)

    acc = jnp.zeros((1, W), jnp.float32)
    # C is small (RGB); static unroll keeps every roll strictly 2-D (no
    # cross-channel wraparound) and gives the scheduler full visibility.
    for c in range(C):
        # TODO(synk): with bf16 inputs on v6e/v7x keep the sub/abs math in
        # bf16 (accumulate in f32) for ~2x VPU throughput; v5e must stay f32.
        p = pred_ref[c].astype(jnp.float32)
        t = gt_ref[c].astype(jnp.float32)

        @pl.when(i == 0)          # grad(gt): once per (b, h-tile), reused i > 0
        def _():
            ghalo = ghalo_ref[pl.ds(c, 1), :].astype(jnp.float32)
            gt_grad_ref[c] = grad2d(t, ghalo)

        phalo = phalo_ref[pl.ds(c, 1), :].astype(jnp.float32)
        d = p - t
        contrib = d * d + jnp.abs(grad2d(p, phalo) - gt_grad_ref[c])
        acc = acc + jnp.sum(contrib, axis=0, keepdims=True)

    out_ref[...] = acc


# ------------------------------- wrapper ----------------------------------- #

def _pick_tile_rows(C, H, W, itemsize):
    """Rows per H-tile: a multiple of 8 that divides H, with the (C, TH, W)
    input block kept around ~1 MiB so double-buffered blocks + f32 scratch fit
    comfortably inside every generation's default scoped-VMEM limit."""
    if H % 8 != 0:
        return H                                      # small/odd heights: one tile
    target = max(8, (1 << 20) // max(1, C * W * itemsize))
    th = max(8, min(H, (target // 8) * 8))
    while th > 8 and H % th != 0:
        th -= 8
    return th if H % th == 0 else H


def _tile_top_halo(x, TH):
    """x: (..., C, H, W) -> (..., HT, C, W): the image row just above each
    H-tile (zeros for the first tile).  Tiny: 1/TH of x, strided row read."""
    *lead, C, H, W = x.shape
    HT = H // TH
    zero = jnp.zeros((*lead, 1, C, W), x.dtype)
    if HT == 1:
        return zero
    rows = x[..., TH - 1:H - 1:TH, :]                 # (..., C, HT-1, W)
    rows = jnp.moveaxis(rows, -2, -3)                 # (..., HT-1, C, W)
    return jnp.concatenate([zero, rows], axis=-3)     # (..., HT, C, W)


def _loss_total(pred, gt):
    """pred: (B, I, C, H, W); gt: (B, C, H, W).  Returns the f32 scalar
        sum_{b,i,c,h,w} (pred - gt)^2 + |grad(pred) - grad(gt)|
    with a single fused pallas_call.  grid = (B, H-tiles, I) with I innermost
    so the ground-truth block and its cached gradient stay resident across i
    (one HBM read / one gradient evaluation per (b, h-tile))."""
    B, I, C, H, W = pred.shape
    itemsize = jnp.dtype(pred.dtype).itemsize
    TH = _pick_tile_rows(C, H, W, itemsize)
    HT = H // TH

    pred_halo = _tile_top_halo(pred, TH)              # (B, I, HT, C, W)
    gt_halo = _tile_top_halo(gt, TH)                  # (B, HT, C, W)

    cost = pl.CostEstimate(
        flops=22 * B * I * C * H * W,
        transcendentals=0,
        bytes_accessed=int(pred.size * itemsize
                           + gt.size * jnp.dtype(gt.dtype).itemsize
                           + pred_halo.size * itemsize
                           + gt_halo.size * jnp.dtype(gt.dtype).itemsize
                           + B * HT * I * W * 4))

    partial = pl.pallas_call(
        _loss_partial_kernel,
        out_shape=jax.ShapeDtypeStruct((B, HT, I, 1, W), jnp.float32),
        grid=(B, HT, I),
        in_specs=[
            # (C, TH, W) prediction tile for slice i.
            pl.BlockSpec((None, None, C, TH, W), lambda b, h, i: (b, i, 0, h, 0)),
            # Ground-truth tile: index independent of i -> VMEM-resident across
            # the innermost axis (read from HBM once per (b, h-tile)).
            pl.BlockSpec((None, C, TH, W), lambda b, h, i: (b, 0, h, 0)),
            # Halo rows (image row just above this tile) for pred / gt.
            pl.BlockSpec((None, None, None, C, W), lambda b, h, i: (b, i, h, 0, 0)),
            pl.BlockSpec((None, None, C, W), lambda b, h, i: (b, h, 0, 0)),
        ],
        # One tiny (1, W) partial per grid step: no cross-step accumulation,
        # no output revisits, negligible output HBM traffic.
        out_specs=pl.BlockSpec((None, None, None, 1, W),
                               lambda b, h, i: (b, h, i, 0, 0)),
        scratch_shapes=[pltpu.VMEM((C, TH, W), jnp.float32)],   # cached grad(gt)
        compiler_params=pltpu.CompilerParams(
            dimension_semantics=("parallel", "parallel", "arbitrary")),
        cost_estimate=cost,
    )(pred, gt, pred_halo, gt_halo)

    return jnp.sum(partial)


def loss_func(pred_img_i, pred_img, ground_truth, global_step,
              coeff_basic=1.0, coeff_anneal=1.0, alpha=0.9998, beta=100):
    """LossFunc.forward -> (coeff_basic * basic, coeff_anneal * anneal)."""
    B, N, C, H, W = pred_img_i.shape
    denom = float(B * C * H * W)

    # LossBasic(pred_img, gt): I = 1 via a free [:, None] reshape (no copy).
    basic_sum = _loss_total(pred_img[:, None], ground_truth)
    basic = coeff_basic * basic_sum / denom

    # LossAnneal: all N slices in one launch.
    anneal_sum = _loss_total(pred_img_i, ground_truth)
    anneal_mean = anneal_sum / (float(N) * denom)
    anneal = coeff_anneal * beta * (alpha ** global_step) * anneal_mean
    return basic, anneal


# ------------------------- pure-JAX reference ------------------------------ #

def _grad_ref(img):
    zpad_w = jnp.zeros(img.shape[:-1] + (1,), img.dtype)
    zpad_h = jnp.zeros(img.shape[:-2] + (1, img.shape[-1]), img.dtype)
    left = jnp.concatenate([zpad_w, img[..., :-1]], axis=-1)
    up = jnp.concatenate([zpad_h, img[..., :-1, :]], axis=-2)
    return jnp.abs(left - img) + jnp.abs(up - img)


def _loss_basic_ref(p, t):
    return jnp.mean((p - t) ** 2) + jnp.mean(jnp.abs(_grad_ref(p) - _grad_ref(t)))


def _loss_func_ref(pred_img_i, pred_img, gt, step,
                   coeff_basic=1.0, coeff_anneal=1.0, alpha=0.9998, beta=100):
    basic = coeff_basic * _loss_basic_ref(pred_img, gt)
    N = pred_img_i.shape[1]
    l = 0.0
    for i in range(N):
        l = l + _loss_basic_ref(pred_img_i[:, i], gt)
    l = l / N
    anneal = coeff_anneal * beta * (alpha ** step) * l
    return basic, anneal


# --------------------------------- main ------------------------------------ #

if __name__ == "__main__":
    key = jax.random.PRNGKey(0)
    k1, k2, k3 = jax.random.split(key, 3)

    B, N, C, H, W = 2, 3, 3, 16, 16
    pred_img_i = jax.random.uniform(k1, (B, N, C, H, W), dtype=jnp.float32)
    pred_img = jax.random.uniform(k2, (B, C, H, W), dtype=jnp.float32)
    ground_truth = jax.random.uniform(k3, (B, C, H, W), dtype=jnp.float32)
    global_step = 5

    basic, anneal = loss_func(pred_img_i, pred_img, ground_truth, global_step)
    jax.block_until_ready((basic, anneal))

    # self-check against a pure-JAX reference of the PyTorch semantics
    ref_basic, ref_anneal = _loss_func_ref(pred_img_i, pred_img, ground_truth,
                                           global_step)
    assert jnp.allclose(basic, ref_basic, rtol=1e-4, atol=1e-5), (basic, ref_basic)
    assert jnp.allclose(anneal, ref_anneal, rtol=1e-4, atol=1e-5), (anneal, ref_anneal)

    print("KERNEL_OK")
</pallas_src>

<mosaic_0001>
module attributes {stable_mosaic.version = 11 : i64} {
  func.func @_loss_partial_kernel(%arg0: i32, %arg1: i32, %arg2: i32, %arg3: memref<1x1x3x16x16xf32, #tpu.memory_space<vmem>>, %arg4: memref<1x3x16x16xf32, #tpu.memory_space<vmem>>, %arg5: memref<1x1x1x3x16xf32, #tpu.memory_space<vmem>>, %arg6: memref<1x1x3x16xf32, #tpu.memory_space<vmem>>, %arg7: memref<1x1x1x1x16xf32, #tpu.memory_space<vmem>>, %arg8: memref<3x16x16xf32, #tpu.memory_space<vmem>>) attributes {dimension_semantics = [#tpu.dimension_semantics<parallel>, #tpu.dimension_semantics<parallel>, #tpu.dimension_semantics<arbitrary>], iteration_bounds = array<i64: 2, 1, 1>, scalar_prefetch = 0 : i64, scratch_operands = 1 : i64, tpu.core_type = #tpu.core_type<tc>, window_params = [{transform_indices = @transform_0, window_bounds = array<i64: 1, 1, 3, 16, 16>}, {transform_indices = @transform_1, window_bounds = array<i64: 1, 3, 16, 16>}, {transform_indices = @transform_2, window_bounds = array<i64: 1, 1, 1, 3, 16>}, {transform_indices = @transform_3, window_bounds = array<i64: 1, 1, 3, 16>}, {transform_indices = @transform_4, window_bounds = array<i64: 1, 1, 1, 1, 16>}]} {
    %0 = tpu.iota {dimensions = array<i32: 1>} : vector<16x16xi32>
    %1 = tpu.iota {dimensions = array<i32: 0>} : vector<16x16xi32>
    %c0_i32 = arith.constant 0 : i32
    %2 = vector.broadcast %c0_i32 : i32 to vector<16x16xi32>
    %3 = arith.cmpi ne, %0, %2 : vector<16x16xi32>
    %c0_i32_0 = arith.constant 0 : i32
    %4 = vector.broadcast %c0_i32_0 : i32 to vector<16x16xi32>
    %5 = arith.cmpi eq, %1, %4 : vector<16x16xi32>
    %cst = arith.constant 0.000000e+00 : f32
    %6 = vector.broadcast %cst : f32 to vector<1x16xf32>
    %c0 = arith.constant 0 : index
    %c0_1 = arith.constant 0 : index
    %c0_2 = arith.constant 0 : index
    %c0_3 = arith.constant 0 : index
    %c0_4 = arith.constant 0 : index
    %7 = vector.load %arg3[%c0, %c0_1, %c0_2, %c0_3, %c0_4] : memref<1x1x3x16x16xf32, #tpu.memory_space<vmem>>, vector<1x1x1x16x16xf32>
    %8 = vector.shape_cast %7 : vector<1x1x1x16x16xf32> to vector<16x16xf32>
    %c0_5 = arith.constant 0 : index
    %c0_6 = arith.constant 0 : index
    %c0_7 = arith.constant 0 : index
    %c0_8 = arith.constant 0 : index
    %9 = vector.load %arg4[%c0_5, %c0_6, %c0_7, %c0_8] : memref<1x3x16x16xf32, #tpu.memory_space<vmem>>, vector<1x1x16x16xf32>
    %10 = vector.shape_cast %9 : vector<1x1x16x16xf32> to vector<16x16xf32>
    %c0_i32_9 = arith.constant 0 : i32
    %11 = arith.cmpi eq, %arg2, %c0_i32_9 : i32
    %12 = arith.extui %11 : i1 to i32
    %c0_i32_10 = arith.constant 0 : i32
    %13 = arith.cmpi ne, %12, %c0_i32_10 : i32
    scf.if %13 {
      %c0_71 = arith.constant 0 : index
      %c0_72 = arith.constant 0 : index
      %c0_73 = arith.constant 0 : index
      %c0_74 = arith.constant 0 : index
      %103 = vector.load %arg6[%c0_71, %c0_72, %c0_73, %c0_74] : memref<1x1x3x16xf32, #tpu.memory_space<vmem>>, vector<1x1x1x16xf32>
      %104 = vector.shape_cast %103 : vector<1x1x1x16xf32> to vector<1x16xf32>
      %c1_i32_75 = arith.constant 1 : i32
      %105 = tpu.dynamic_rotate %10 by %c1_i32_75 dim 1 : vector<16x16xf32>, i32 -> vector<16x16xf32>
      %cst_76 = arith.constant 0.000000e+00 : f32
      %106 = vector.broadcast %cst_76 : f32 to vector<16x16xf32>
      %107 = arith.select %3, %105, %106 : vector<16x16xi1>, vector<16x16xf32>
      %c1_i32_77 = arith.constant 1 : i32
      %108 = tpu.dynamic_rotate %10 by %c1_i32_77 dim 0 : vector<16x16xf32>, i32 -> vector<16x16xf32>
      %109 = vector.shape_cast %104 : vector<1x16xf32> to vector<1x16xf32>
      %110 = vector.broadcast %109 : vector<1x16xf32> to vector<16x16xf32>
      %111 = arith.select %5, %110, %108 : vector<16x16xi1>, vector<16x16xf32>
      %112 = arith.subf %107, %10 : vector<16x16xf32>
      %113 = math.absf %112 : vector<16x16xf32>
      %114 = arith.subf %111, %10 : vector<16x16xf32>
      %115 = math.absf %114 : vector<16x16xf32>
      %116 = arith.addf %113, %115 : vector<16x16xf32>
      %c0_78 = arith.constant 0 : index
      %c0_79 = arith.constant 0 : index
      %c0_80 = arith.constant 0 : index
      %117 = vector.load %arg8[%c0_78, %c0_79, %c0_80] : memref<3x16x16xf32, #tpu.memory_space<vmem>>, vector<1x16x16xf32>
      %118 = vector.shape_cast %117 : vector<1x16x16xf32> to vector<16x16xf32>
      %119 = vector.shape_cast %116 : vector<16x16xf32> to vector<1x16x16xf32>
      tpu.vector_store %arg8[%c0_78, %c0_79, %c0_80], %119 {strides = array<i32>} : memref<3x16x16xf32, #tpu.memory_space<vmem>>, vector<1x16x16xf32>,
    } else {
    }
    %c0_11 = arith.constant 0 : index
    %c0_12 = arith.constant 0 : index
    %c0_13 = arith.constant 0 : index
    %c0_14 = arith.constant 0 : index
    %c0_15 = arith.constant 0 : index
    %14 = vector.load %arg5[%c0_11, %c0_12, %c0_13, %c0_14, %c0_15] : memref<1x1x1x3x16xf32, #tpu.memory_space<vmem>>, vector<1x1x1x1x16xf32>
    %15 = vector.shape_cast %14 : vector<1x1x1x1x16xf32> to vector<1x16xf32>
    %16 = arith.subf %8, %10 : vector<16x16xf32>
    %17 = arith.mulf %16, %16 : vector<16x16xf32>
    %c1_i32 = arith.constant 1 : i32
    %18 = tpu.dynamic_rotate %8 by %c1_i32 dim 1 : vector<16x16xf32>, i32 -> vector<16x16xf32>
    %cst_16 = arith.constant 0.000000e+00 : f32
    %19 = vector.broadcast %cst_16 : f32 to vector<16x16xf32>
    %20 = arith.select %3, %18, %19 : vector<16x16xi1>, vector<16x16xf32>
    %c1_i32_17 = arith.constant 1 : i32
    %21 = tpu.dynamic_rotate %8 by %c1_i32_17 dim 0 : vector<16x16xf32>, i32 -> vector<16x16xf32>
    %22 = vector.shape_cast %15 : vector<1x16xf32> to vector<1x16xf32>
    %23 = vector.broadcast %22 : vector<1x16xf32> to vector<16x16xf32>
    %24 = arith.select %5, %23, %21 : vector<16x16xi1>, vector<16x16xf32>
    %25 = arith.subf %20, %8 : vector<16x16xf32>
    %26 = math.absf %25 : vector<16x16xf32>
    %27 = arith.subf %24, %8 : vector<16x16xf32>
    %28 = math.absf %27 : vector<16x16xf32>
    %29 = arith.addf %26, %28 : vector<16x16xf32>
    %c0_18 = arith.constant 0 : index
    %c0_19 = arith.constant 0 : index
    %c0_20 = arith.constant 0 : index
    %30 = vector.load %arg8[%c0_18, %c0_19, %c0_20] : memref<3x16x16xf32, #tpu.memory_space<vmem>>, vector<1x16x16xf32>
    %31 = vector.shape_cast %30 : vector<1x16x16xf32> to vector<16x16xf32>
    %32 = arith.subf %29, %31 : vector<16x16xf32>
    %33 = math.absf %32 : vector<16x16xf32>
    %34 = arith.addf %17, %33 : vector<16x16xf32>
    %cst_21 = arith.constant dense<0.000000e+00> : vector<16xf32>
    %35 = vector.multi_reduction <add>, %34, %cst_21 [0] : vector<16x16xf32> to vector<16xf32>
    %36 = vector.shape_cast %35 : vector<16xf32> to vector<1x16xf32>
    %37 = arith.addf %6, %36 : vector<1x16xf32>
    %c0_22 = arith.constant 0 : index
    %c0_23 = arith.constant 0 : index
    %c1 = arith.constant 1 : index
    %c0_24 = arith.constant 0 : index
    %c0_25 = arith.constant 0 : index
    %38 = vector.load %arg3[%c0_22, %c0_23, %c1, %c0_24, %c0_25] : memref<1x1x3x16x16xf32, #tpu.memory_space<vmem>>, vector<1x1x1x16x16xf32>
    %39 = vector.shape_cast %38 : vector<1x1x1x16x16xf32> to vector<16x16xf32>
    %c0_26 = arith.constant 0 : index
    %c1_27 = arith.constant 1 : index
    %c0_28 = arith.constant 0 : index
    %c0_29 = arith.constant 0 : index
    %40 = vector.load %arg4[%c0_26, %c1_27, %c0_28, %c0_29] : memref<1x3x16x16xf32, #tpu.memory_space<vmem>>, vector<1x1x16x16xf32>
    %41 = vector.shape_cast %40 : vector<1x1x16x16xf32> to vector<16x16xf32>
    %c0_i32_30 = arith.constant 0 : i32
    %42 = arith.cmpi eq, %arg2, %c0_i32_30 : i32
    %43 = arith.extui %42 : i1 to i32
    %c0_i32_31 = arith.constant 0 : i32
    %44 = arith.cmpi ne, %43, %c0_i32_31 : i32
    scf.if %44 {
      %c0_71 = arith.constant 0 : index
      %c0_72 = arith.constant 0 : index
      %c1_73 = arith.constant 1 : index
      %c0_74 = arith.constant 0 : index
      %103 = vector.load %arg6[%c0_71, %c0_72, %c1_73, %c0_74] : memref<1x1x3x16xf32, #tpu.memory_space<vmem>>, vector<1x1x1x16xf32>
      %104 = vector.shape_cast %103 : vector<1x1x1x16xf32> to vector<1x16xf32>
      %c1_i32_75 = arith.constant 1 : i32
      %105 = tpu.dynamic_rotate %41 by %c1_i32_75 dim 1 : vector<16x16xf32>, i32 -> vector<16x16xf32>
      %cst_76 = arith.constant 0.000000e+00 : f32
      %106 = vector.broadcast %cst_76 : f32 to vector<16x16xf32>
      %107 = arith.select %3, %105, %106 : vector<16x16xi1>, vector<16x16xf32>
      %c1_i32_77 = arith.constant 1 : i32
      %108 = tpu.dynamic_rotate %41 by %c1_i32_77 dim 0 : vector<16x16xf32>, i32 -> vector<16x16xf32>
      %109 = vector.shape_cast %104 : vector<1x16xf32> to vector<1x16xf32>
      %110 = vector.broadcast %109 : vector<1x16xf32> to vector<16x16xf32>
      %111 = arith.select %5, %110, %108 : vector<16x16xi1>, vector<16x16xf32>
      %112 = arith.subf %107, %41 : vector<16x16xf32>
      %113 = math.absf %112 : vector<16x16xf32>
      %114 = arith.subf %111, %41 : vector<16x16xf32>
      %115 = math.absf %114 : vector<16x16xf32>
      %116 = arith.addf %113, %115 : vector<16x16xf32>
      %c1_78 = arith.constant 1 : index
      %c0_79 = arith.constant 0 : index
      %c0_80 = arith.constant 0 : index
      %117 = vector.load %arg8[%c1_78, %c0_79, %c0_80] : memref<3x16x16xf32, #tpu.memory_space<vmem>>, vector<1x16x16xf32>
      %118 = vector.shape_cast %117 : vector<1x16x16xf32> to vector<16x16xf32>
      %119 = vector.shape_cast %116 : vector<16x16xf32> to vector<1x16x16xf32>
      tpu.vector_store %arg8[%c1_78, %c0_79, %c0_80], %119 {strides = array<i32>} : memref<3x16x16xf32, #tpu.memory_space<vmem>>, vector<1x16x16xf32>,
    } else {
    }
    %c0_32 = arith.constant 0 : index
    %c0_33 = arith.constant 0 : index
    %c0_34 = arith.constant 0 : index
    %c1_35 = arith.constant 1 : index
    %c0_36 = arith.constant 0 : index
    %45 = vector.load %arg5[%c0_32, %c0_33, %c0_34, %c1_35, %c0_36] : memref<1x1x1x3x16xf32, #tpu.memory_space<vmem>>, vector<1x1x1x1x16xf32>
    %46 = vector.shape_cast %45 : vector<1x1x1x1x16xf32> to vector<1x16xf32>
    %47 = arith.subf %39, %41 : vector<16x16xf32>
    %48 = arith.mulf %47, %47 : vector<16x16xf32>
    %c1_i32_37 = arith.constant 1 : i32
    %49 = tpu.dynamic_rotate %39 by %c1_i32_37 dim 1 : vector<16x16xf32>, i32 -> vector<16x16xf32>
    %cst_38 = arith.constant 0.000000e+00 : f32
    %50 = vector.broadcast %cst_38 : f32 to vector<16x16xf32>
    %51 = arith.select %3, %49, %50 : vector<16x16xi1>, vector<16x16xf32>
    %c1_i32_39 = arith.constant 1 : i32
    %52 = tpu.dynamic_rotate %39 by %c1_i32_39 dim 0 : vector<16x16xf32>, i32 -> vector<16x16xf32>
    %53 = vector.shape_cast %46 : vector<1x16xf32> to vector<1x16xf32>
    %54 = vector.broadcast %53 : vector<1x16xf32> to vector<16x16xf32>
    %55 = arith.select %5, %54, %52 : vector<16x16xi1>, vector<16x16xf32>
    %56 = arith.subf %51, %39 : vector<16x16xf32>
    %57 = math.absf %56 : vector<16x16xf32>
    %58 = arith.subf %55, %39 : vector<16x16xf32>
    %59 = math.absf %58 : vector<16x16xf32>
    %60 = arith.addf %57, %59 : vector<16x16xf32>
    %c1_40 = arith.constant 1 : index
    %c0_41 = arith.constant 0 : index
    %c0_42 = arith.constant 0 : index
    %61 = vector.load %arg8[%c1_40, %c0_41, %c0_42] : memref<3x16x16xf32, #tpu.memory_space<vmem>>, vector<1x16x16xf32>
    %62 = vector.shape_cast %61 : vector<1x16x16xf32> to vector<16x16xf32>
    %63 = arith.subf %60, %62 : vector<16x16xf32>
    %64 = math.absf %63 : vector<16x16xf32>
    %65 = arith.addf %48, %64 : vector<16x16xf32>
    %cst_43 = arith.constant dense<0.000000e+00> : vector<16xf32>
    %66 = vector.multi_reduction <add>, %65, %cst_43 [0] : vector<16x16xf32> to vector<16xf32>
    %67 = vector.shape_cast %66 : vector<16xf32> to vector<1x16xf32>
    %68 = arith.addf %37, %67 : vector<1x16xf32>
    %c0_44 = arith.constant 0 : index
    %c0_45 = arith.constant 0 : index
    %c2 = arith.constant 2 : index
    %c0_46 = arith.constant 0 : index
    %c0_47 = arith.constant 0 : index
    %69 = vector.load %arg3[%c0_44, %c0_45, %c2, %c0_46, %c0_47] : memref<1x1x3x16x16xf32, #tpu.memory_space<vmem>>, vector<1x1x1x16x16xf32>
    %70 = vector.shape_cast %69 : vector<1x1x1x16x16xf32> to vector<16x16xf32>
    %c0_48 = arith.constant 0 : index
    %c2_49 = arith.constant 2 : index
    %c0_50 = arith.constant 0 : index
    %c0_51 = arith.constant 0 : index
    %71 = vector.load %arg4[%c0_48, %c2_49, %c0_50, %c0_51] : memref<1x3x16x16xf32, #tpu.memory_space<vmem>>, vector<1x1x16x16xf32>
    %72 = vector.shape_cast %71 : vector<1x1x16x16xf32> to vector<16x16xf32>
    %c0_i32_52 = arith.constant 0 : i32
    %73 = arith.cmpi eq, %arg2, %c0_i32_52 : i32
    %74 = arith.extui %73 : i1 to i32
    %c0_i32_53 = arith.constant 0 : i32
    %75 = arith.cmpi ne, %74, %c0_i32_53 : i32
    scf.if %75 {
      %c0_71 = arith.constant 0 : index
      %c0_72 = arith.constant 0 : index
      %c2_73 = arith.constant 2 : index
      %c0_74 = arith.constant 0 : index
      %103 = vector.load %arg6[%c0_71, %c0_72, %c2_73, %c0_74] : memref<1x1x3x16xf32, #tpu.memory_space<vmem>>, vector<1x1x1x16xf32>
      %104 = vector.shape_cast %103 : vector<1x1x1x16xf32> to vector<1x16xf32>
      %c1_i32_75 = arith.constant 1 : i32
      %105 = tpu.dynamic_rotate %72 by %c1_i32_75 dim 1 : vector<16x16xf32>, i32 -> vector<16x16xf32>
      %cst_76 = arith.constant 0.000000e+00 : f32
      %106 = vector.broadcast %cst_76 : f32 to vector<16x16xf32>
      %107 = arith.select %3, %105, %106 : vector<16x16xi1>, vector<16x16xf32>
      %c1_i32_77 = arith.constant 1 : i32
      %108 = tpu.dynamic_rotate %72 by %c1_i32_77 dim 0 : vector<16x16xf32>, i32 -> vector<16x16xf32>
      %109 = vector.shape_cast %104 : vector<1x16xf32> to vector<1x16xf32>
      %110 = vector.broadcast %109 : vector<1x16xf32> to vector<16x16xf32>
      %111 = arith.select %5, %110, %108 : vector<16x16xi1>, vector<16x16xf32>
      %112 = arith.subf %107, %72 : vector<16x16xf32>
      %113 = math.absf %112 : vector<16x16xf32>
      %114 = arith.subf %111, %72 : vector<16x16xf32>
      %115 = math.absf %114 : vector<16x16xf32>
      %116 = arith.addf %113, %115 : vector<16x16xf32>
      %c2_78 = arith.constant 2 : index
      %c0_79 = arith.constant 0 : index
      %c0_80 = arith.constant 0 : index
      %117 = vector.load %arg8[%c2_78, %c0_79, %c0_80] : memref<3x16x16xf32, #tpu.memory_space<vmem>>, vector<1x16x16xf32>
      %118 = vector.shape_cast %117 : vector<1x16x16xf32> to vector<16x16xf32>
      %119 = vector.shape_cast %116 : vector<16x16xf32> to vector<1x16x16xf32>
      tpu.vector_store %arg8[%c2_78, %c0_79, %c0_80], %119 {strides = array<i32>} : memref<3x16x16xf32, #tpu.memory_space<vmem>>, vector<1x16x16xf32>,
    } else {
    }
    %c0_54 = arith.constant 0 : index
    %c0_55 = arith.constant 0 : index
    %c0_56 = arith.constant 0 : index
    %c2_57 = arith.constant 2 : index
    %c0_58 = arith.constant 0 : index
    %76 = vector.load %arg5[%c0_54, %c0_55, %c0_56, %c2_57, %c0_58] : memref<1x1x1x3x16xf32, #tpu.memory_space<vmem>>, vector<1x1x1x1x16xf32>
    %77 = vector.shape_cast %76 : vector<1x1x1x1x16xf32> to vector<1x16xf32>
    %78 = arith.subf %70, %72 : vector<16x16xf32>
    %79 = arith.mulf %78, %78 : vector<16x16xf32>
    %c1_i32_59 = arith.constant 1 : i32
    %80 = tpu.dynamic_rotate %70 by %c1_i32_59 dim 1 : vector<16x16xf32>, i32 -> vector<16x16xf32>
    %cst_60 = arith.constant 0.000000e+00 : f32
    %81 = vector.broadcast %cst_60 : f32 to vector<16x16xf32>
    %82 = arith.select %3, %80, %81 : vector<16x16xi1>, vector<16x16xf32>
    %c1_i32_61 = arith.constant 1 : i32
    %83 = tpu.dynamic_rotate %70 by %c1_i32_61 dim 0 : vector<16x16xf32>, i32 -> vector<16x16xf32>
    %84 = vector.shape_cast %77 : vector<1x16xf32> to vector<1x16xf32>
    %85 = vector.broadcast %84 : vector<1x16xf32> to vector<16x16xf32>
    %86 = arith.select %5, %85, %83 : vector<16x16xi1>, vector<16x16xf32>
    %87 = arith.subf %82, %70 : vector<16x16xf32>
    %88 = math.absf %87 : vector<16x16xf32>
    %89 = arith.subf %86, %70 : vector<16x16xf32>
    %90 = math.absf %89 : vector<16x16xf32>
    %91 = arith.addf %88, %90 : vector<16x16xf32>
    %c2_62 = arith.constant 2 : index
    %c0_63 = arith.constant 0 : index
    %c0_64 = arith.constant 0 : index
    %92 = vector.load %arg8[%c2_62, %c0_63, %c0_64] : memref<3x16x16xf32, #tpu.memory_space<vmem>>, vector<1x16x16xf32>
    %93 = vector.shape_cast %92 : vector<1x16x16xf32> to vector<16x16xf32>
    %94 = arith.subf %91, %93 : vector<16x16xf32>
    %95 = math.absf %94 : vector<16x16xf32>
    %96 = arith.addf %79, %95 : vector<16x16xf32>
    %cst_65 = arith.constant dense<0.000000e+00> : vector<16xf32>
    %97 = vector.multi_reduction <add>, %96, %cst_65 [0] : vector<16x16xf32> to vector<16xf32>
    %98 = vector.shape_cast %97 : vector<16xf32> to vector<1x16xf32>
    %99 = arith.addf %68, %98 : vector<1x16xf32>
    %c0_66 = arith.constant 0 : index
    %c0_67 = arith.constant 0 : index
    %c0_68 = arith.constant 0 : index
    %c0_69 = arith.constant 0 : index
    %c0_70 = arith.constant 0 : index
    %100 = vector.load %arg7[%c0_66, %c0_67, %c0_68, %c0_69, %c0_70] : memref<1x1x1x1x16xf32, #tpu.memory_space<vmem>>, vector<1x1x1x1x16xf32>
    %101 = vector.shape_cast %100 : vector<1x1x1x1x16xf32> to vector<1x16xf32>
    %102 = vector.shape_cast %99 : vector<1x16xf32> to vector<1x1x1x1x16xf32>
    tpu.vector_store %arg7[%c0_66, %c0_67, %c0_68, %c0_69, %c0_70], %102 {strides = array<i32>} : memref<1x1x1x1x16xf32, #tpu.memory_space<vmem>>, vector<1x1x1x1x16xf32>,
    return
  }
  func.func @transform_0(%arg0: i32, %arg1: i32, %arg2: i32) -> (i32, i32, i32, i32, i32) {
    %c0_i32 = arith.constant 0 : i32
    %c0_i32_0 = arith.constant 0 : i32
    %c0_i32_1 = arith.constant 0 : i32
    return %arg0, %arg2, %c0_i32, %arg1, %c0_i32_0 : i32, i32, i32, i32, i32
  }
  func.func @transform_1(%arg0: i32, %arg1: i32, %arg2: i32) -> (i32, i32, i32, i32) {
    %c0_i32 = arith.constant 0 : i32
    %c0_i32_0 = arith.constant 0 : i32
    %c0_i32_1 = arith.constant 0 : i32
    return %arg0, %c0_i32, %arg1, %c0_i32_0 : i32, i32, i32, i32
  }
  func.func @transform_2(%arg0: i32, %arg1: i32, %arg2: i32) -> (i32, i32, i32, i32, i32) {
    %c0_i32 = arith.constant 0 : i32
    %c0_i32_0 = arith.constant 0 : i32
    %c0_i32_1 = arith.constant 0 : i32
    return %arg0, %arg2, %arg1, %c0_i32, %c0_i32_0 : i32, i32, i32, i32, i32
  }
  func.func @transform_3(%arg0: i32, %arg1: i32, %arg2: i32) -> (i32, i32, i32, i32) {
    %c0_i32 = arith.constant 0 : i32
    %c0_i32_0 = arith.constant 0 : i32
    %c0_i32_1 = arith.constant 0 : i32
    return %arg0, %arg1, %c0_i32, %c0_i32_0 : i32, i32, i32, i32
  }
  func.func @transform_4(%arg0: i32, %arg1: i32, %arg2: i32) -> (i32, i32, i32, i32, i32) {
    %c0_i32 = arith.constant 0 : i32
    %c0_i32_0 = arith.constant 0 : i32
    %c0_i32_1 = arith.constant 0 : i32
    return %arg0, %arg1, %arg2, %c0_i32, %c0_i32_0 : i32, i32, i32, i32, i32
  }
}

</mosaic_0001>

<llo_original>
// kernel: tpu_custom_call.1
$region0: #{tpu_custom_call.1}
  #allocation0 [shape = 'u32[]', space=smem, size = 0x4, offset = 0x4, fixed_abs, tag = 'smem constant byte address 0x4 - core index']
  #allocation1 [shape = 'u32[144,128]{1,0:T(1,128)}', space=vmem, size = 0x12000, scoped, tag = 'internal scratch']
  #allocation2 [shape = 'f32[3,16,16]{2,1,0:T(8,128)}', space=vmem, size = 0x6000, scoped, tag = 'scratch operand']
  %s0 = inlined_call_operand.hbm [shape: f32[2,1,3,16,16], index: 0, kind: input, shape index: {}]
  %s1 = inlined_call_operand.hbm [shape: f32[2,3,16,16], index: 1, kind: input, shape index: {}]
  %s2 = inlined_call_operand.vmem [shape: f32[2,1,1,3,16], index: 2, kind: input, shape index: {}]
  %s3 = inlined_call_operand.vmem [shape: f32[2,1,3,16], index: 3, kind: input, shape index: {}]
  %s4 = inlined_call_operand.hbm [shape: f32[2,1,1,1,16], index: 4, kind: output, shape index: {}]
  %s5 = sld [smem:[#allocation0]]
  $region69: #{tpu_custom_call.1} parent=0
    _
  %s7 = ssub.s32 1, %s5
  %s8 = scalar_select 0, %s7, %s5
  $region1: #{tpu_custom_call.1} parent=0
    #allocation3 [shape = 'u8[49152]{0}', space=vmem, size = 0xc000, scoped, tag = 'input window, operand 0']
    #allocation4 [shape = 's32[2]{0}', space=sflag, size = 0x8, scoped, tag = 'scoped memory for tpu_custom_call.1']
    #allocation5 [shape = 's32[2]{0}', space=sflag, size = 0x8, scoped, tag = 'scoped memory for tpu_custom_call.1']
    #allocation6 [shape = 'u8[49152]{0}', space=vmem, size = 0xc000, scoped, tag = 'input window, operand 1']
    #allocation7 [shape = 's32[2]{0}', space=sflag, size = 0x8, scoped, tag = 'scoped memory for tpu_custom_call.1']
    #allocation8 [shape = 'u8[1024]{0}', space=vmem, size = 0x400, scoped, tag = 'output window, operand 0']
    %9 = vsyncpa [#allocation4], 0
    %s10 = scalar_lea.sflag [#allocation4], 1
    %11 = vsyncpa %s10, 0
    %12 = vsyncpa [#allocation7], 0
    %s13 = scalar_lea.sflag [#allocation7], 1
    %14 = vsyncpa %s13, 0
    %15 = vsyncpa [#allocation5], 0
    %s16 = scalar_lea.sflag [#allocation5], 1
    %17 = vsyncpa %s16, 0
    loop: start=0, step=1, limit=4
    $region2: #{tpu_custom_call.1} parent=1 // loop_pre_header
      _
    $region3: #{tpu_custom_call.1} parent=1 // loop_header
      %s19 = sphi 0, %s23
      %p20 = scmp.ge.s32.totalorder %s19, 4
      %s26 = sphi 0, %s45
      %s27 = sphi 0, %s41
      %s28 = sphi 0, %s37
      %s29 = sphi 0, %s26
      %s30 = sphi 0, %s27
      %s31 = sphi 0, %s28
      %s32 = sphi 0, %s29
      %s33 = sphi 0, %s30
      %s34 = sphi 0, %s31
      %s52 = sphi 0, %s54
      %s55 = sphi 0, %s52
      %s56 = sphi 0, %s55
      %s72 = sphi 0, %s56
      %s80 = sphi 0, %s82
      %s83 = sphi 0, %s80
      %s84 = sphi 0, %s83
      %s100 = sphi 0, %s84
      %s110 = sphi 0, %s112
      %s113 = sphi 0, %s110
      %s114 = sphi 0, %s113
      %s130 = sphi 0, %s114
      %s138 = sphi 0, %s140
      %s141 = sphi 0, %s138
      %s142 = sphi 0, %s141
      %s158 = sphi 0, %s142
      %s168 = sphi 0, %s170
      %s171 = sphi 0, %s168
      %s172 = sphi 0, %s171
      %s188 = sphi 0, %s172
    $region4: #{tpu_custom_call.1} parent=1 // loop_header_branch
      %22 = sbr.rel (%p20) target = $region8
    $region5: #{tpu_custom_call.1} parent=1 // loop_body
      %s24 = ssub.s32 %s19, 1
      %s25 = ssub.s32 %s19, 2
      %s35 = sadd.s32 1, %s28
      %p36 = scmp.ge.s32.totalorder %s35, 1
      %s37 = scalar_select %p36, 0, %s35
      %s38 = sadd.s32 1, %s27
      %s39 = scalar_select %p36, %s38, %s27
      %p40 = scmp.ge.s32.totalorder %s39, 1
      %s41 = scalar_select %p40, 0, %s39
      %s42 = sadd.s32 1, %s26
      %s43 = scalar_select %p40, %s42, %s26
      %p44 = scmp.ge.s32.totalorder %s43, 2
      %s45 = scalar_select %p44, 0, %s43
      %s46 = ssub.s32 %s26, %s45
      %s47 = ssub.s32 %s28, %s37
      %s48 = sor.u32 %s46, %s47
      %s49 = ssub.s32 %s27, %s41
      %s50 = sor.u32 %s48, %s49
      %p51 = scmp.eq.s32.totalorder %s50, 0
      %s53 = sadd.s32 %s52, 1
      %s54 = scalar_select %p51, %s52, %s53
      %p57 = pneg %p51
      %p58 = scmp.eq.s32.totalorder %s19, 1
      %p59 = por %p57, %p58
      %p60 = scmp.ne.s32.totalorder %s52, %s55
      %p61 = scmp.eq.s32.totalorder %s19, 0
      %p62 = por %p60, %p61
      %p63 = scmp.ne.s32.totalorder %s52, %s55
      %p64 = scmp.eq.s32.totalorder %s24, 1
      %p65 = por %p63, %p64
      %p66 = scmp.ne.s32.totalorder %s55, %s56
      %p67 = scmp.eq.s32.totalorder %s24, 0
      %p68 = por %p66, %p67
      %p69 = scmp.ne.s32.totalorder %s55, %s56
      %p70 = scmp.eq.s32.totalorder %s25, 1
      %p71 = por %p69, %p70
      %p73 = scmp.ne.s32.totalorder %s56, %s72
      %p74 = scmp.eq.s32.totalorder %s25, 0
      %p75 = por %p73, %p74
      %s76 = ssub.s32 %s26, %s45
      %s77 = ssub.s32 %s27, %s41
      %s78 = sor.u32 %s76, %s77
      %p79 = scmp.eq.s32.totalorder %s78, 0
      %s81 = sadd.s32 %s80, 1
      %s82 = scalar_select %p79, %s80, %s81
      %p85 = pneg %p79
      %p86 = scmp.eq.s32.totalorder %s19, 1
      %p87 = por %p85, %p86
      %p88 = scmp.ne.s32.totalorder %s80, %s83
      %p89 = scmp.eq.s32.totalorder %s19, 0
      %p90 = por %p88, %p89
      %p91 = scmp.ne.s32.totalorder %s80, %s83
      %p92 = scmp.eq.s32.totalorder %s24, 1
      %p93 = por %p91, %p92
      %p94 = scmp.ne.s32.totalorder %s83, %s84
      %p95 = scmp.eq.s32.totalorder %s24, 0
      %p96 = por %p94, %p95
      %p97 = scmp.ne.s32.totalorder %s83, %s84
      %p98 = scmp.eq.s32.totalorder %s25, 1
      %p99 = por %p97, %p98
      %p101 = scmp.ne.s32.totalorder %s84, %s100
      %p102 = scmp.eq.s32.totalorder %s25, 0
      %p103 = por %p101, %p102
      %s104 = ssub.s32 %s26, %s45
      %s105 = ssub.s32 %s28, %s37
      %s106 = sor.u32 %s104, %s105
      %s107 = ssub.s32 %s27, %s41
      %s108 = sor.u32 %s106, %s107
      %p109 = scmp.eq.s32.totalorder %s108, 0
      %s111 = sadd.s32 %s110, 1
      %s112 = scalar_select %p109, %s110, %s111
      %p115 = pneg %p109
      %p116 = scmp.eq.s32.totalorder %s19, 1
      %p117 = por %p115, %p116
      %p118 = scmp.ne.s32.totalorder %s110, %s113
      %p119 = scmp.eq.s32.totalorder %s19, 0
      %p120 = por %p118, %p119
      %p121 = scmp.ne.s32.totalorder %s110, %s113
      %p122 = scmp.eq.s32.totalorder %s24, 1
      %p123 = por %p121, %p122
      %p124 = scmp.ne.s32.totalorder %s113, %s114
      %p125 = scmp.eq.s32.totalorder %s24, 0
      %p126 = por %p124, %p125
      %p127 = scmp.ne.s32.totalorder %s113, %s114
      %p128 = scmp.eq.s32.totalorder %s25, 1
      %p129 = por %p127, %p128
      %p131 = scmp.ne.s32.totalorder %s114, %s130
      %p132 = scmp.eq.s32.totalorder %s25, 0
      %p133 = por %p131, %p132
      %s134 = ssub.s32 %s26, %s45
      %s135 = ssub.s32 %s27, %s41
      %s136 = sor.u32 %s134, %s135
      %p137 = scmp.eq.s32.totalorder %s136, 0
      %s139 = sadd.s32 %s138, 1
      %s140 = scalar_select %p137, %s138, %s139
      %p143 = pneg %p137
      %p144 = scmp.eq.s32.totalorder %s19, 1
      %p145 = por %p143, %p144
      %p146 = scmp.ne.s32.totalorder %s138, %s141
      %p147 = scmp.eq.s32.totalorder %s19, 0
      %p148 = por %p146, %p147
      %p149 = scmp.ne.s32.totalorder %s138, %s141
      %p150 = scmp.eq.s32.totalorder %s24, 1
      %p151 = por %p149, %p150
      %p152 = scmp.ne.s32.totalorder %s141, %s142
      %p153 = scmp.eq.s32.totalorder %s24, 0
      %p154 = por %p152, %p153
      %p155 = scmp.ne.s32.totalorder %s141, %s142
      %p156 = scmp.eq.s32.totalorder %s25, 1
      %p157 = por %p155, %p156
      %p159 = scmp.ne.s32.totalorder %s142, %s158
      %p160 = scmp.eq.s32.totalorder %s25, 0
      %p161 = por %p159, %p160
      %s162 = ssub.s32 %s26, %s45
      %s163 = ssub.s32 %s27, %s41
      %s164 = sor.u32 %s162, %s163
      %s165 = ssub.s32 %s28, %s37
      %s166 = sor.u32 %s164, %s165
      %p167 = scmp.eq.s32.totalorder %s166, 0
      %s169 = sadd.s32 %s168, 1
      %s170 = scalar_select %p167, %s168, %s169
      %p173 = pneg %p167
      %p174 = scmp.eq.s32.totalorder %s19, 1
      %p175 = por %p173, %p174
      %p176 = scmp.ne.s32.totalorder %s168, %s171
      %p177 = scmp.eq.s32.totalorder %s19, 0
      %p178 = por %p176, %p177
      %p179 = scmp.ne.s32.totalorder %s168, %s171
      %p180 = scmp.eq.s32.totalorder %s24, 1
      %p181 = por %p179, %p180
      %p182 = scmp.ne.s32.totalorder %s171, %s172
      %p183 = scmp.eq.s32.totalorder %s24, 0
      %p184 = por %p182, %p183
      %p185 = scmp.ne.s32.totalorder %s171, %s172
      %p186 = scmp.eq.s32.totalorder %s25, 1
      %p187 = por %p185, %p186
      %p189 = scmp.ne.s32.totalorder %s172, %s188
      %p190 = scmp.eq.s32.totalorder %s25, 0
      %p191 = por %p189, %p190
      %p192 = scmp.le.s32.totalorder 1, %s19
      %p193 = scmp.lt.s32.totalorder %s19, 3
      %p194 = pnand %p192, %p193
      %p195 = pneg %p194
      // Predicated region
      $region9: #{tpu_custom_call.1} parent=5 // pred_check
        _
      $region10: #{tpu_custom_call.1} parent=5 // pred_check_branch
        %197 = sbr.rel (%p194) target = $region12
      $region11: #{tpu_custom_call.1} parent=5 // pred_region
        %s198 = ssub.s32 %s19, 1
      $region12: #{tpu_custom_call.1} parent=5 // pred_fallthru
        _
      %p199 = scmp.lt.s32.totalorder %s19, 2
      // Predicated region
      $region13: #{tpu_custom_call.1} parent=5 // pred_check
        %p200 = pneg %p199
      $region14: #{tpu_custom_call.1} parent=5 // pred_check_branch
        %202 = sbr.rel (%p200) target = $region16
      $region15: #{tpu_custom_call.1} parent=5 // pred_region
        // Predicated region
        $region17: #{tpu_custom_call.1} parent=15 // pred_check
          %p203 = pneg %p62
        $region18: #{tpu_custom_call.1} parent=15 // pred_check_branch
          %205 = sbr.rel (%p203) target = $region20
        $region19: #{tpu_custom_call.1} parent=15 // pred_region
          %s206 = sand.u32 %s52, 1
          %s207 = scalar_lea.sflag [#allocation4], %s206
          %s208 = sand.u32 %s52, 1
          %s209 = smul.addr %s208, 48
          %s210 = scalar_lea.vmem [#allocation3], %s209
          %s211 = smul.u32 2, %s27
          %s213 = ssub.s32 768, 768
          %214 = vsyncadd %s207, %s213
          %s215 = smul.addr %s28, 6
          %s216 = sadd.s32 %s211, %s215
          %s217 = smul.addr %s26, 6
          %s218 = sadd.s32 %s216, %s217
          %s219 = smul.addr %s218, 128
          %s220 = scalar_lea.hbm %s0, %s219
          %s221 = sshll.u32 %s210, 4
          %s222 = int_to_ptr.vmem [resolvable:$true] %s221
          %227 = dma.hbm_to_vmem [thread:$0]  %s220, 768, %s222, %s207, 128, 128, 8
        $region20: #{tpu_custom_call.1} parent=15 // pred_fallthru
          _
        // Predicated region
        $region21: #{tpu_custom_call.1} parent=15 // pred_check
          %p228 = pneg %p90
        $region22: #{tpu_custom_call.1} parent=15 // pred_check_branch
          %230 = sbr.rel (%p228) target = $region24
        $region23: #{tpu_custom_call.1} parent=15 // pred_region
          %s231 = sand.u32 %s80, 1
          %s232 = scalar_lea.sflag [#allocation7], %s231
          %s233 = sand.u32 %s80, 1
          %s234 = smul.addr %s233, 48
          %s235 = scalar_lea.vmem [#allocation6], %s234
          %s236 = smul.u32 2, %s27
          %s238 = ssub.s32 768, 768
          %239 = vsyncadd %s232, %s238
          %s240 = smul.addr %s26, 6
          %s241 = sadd.s32 %s236, %s240
          %s242 = smul.addr %s241, 128
          %s243 = scalar_lea.hbm %s1, %s242
          %s244 = sshll.u32 %s235, 4
          %s245 = int_to_ptr.vmem [resolvable:$true] %s244
          %250 = dma.hbm_to_vmem [thread:$0]  %s243, 768, %s245, %s232, 128, 128, 8
        $region24: #{tpu_custom_call.1} parent=15 // pred_fallthru
          _
        // Predicated region
        $region25: #{tpu_custom_call.1} parent=15 // pred_check
          %p251 = pneg %p120
        $region26: #{tpu_custom_call.1} parent=15 // pred_check_branch
          %253 = sbr.rel (%p251) target = $region28
        $region27: #{tpu_custom_call.1} parent=15 // pred_region
          %p254 = scmp.lt.s32.totalorder %s26, 1
          %s255 = scalar_select %p254, %s26, 1
          %p256 = scmp.lt.s32.totalorder %s28, 0
          %s257 = scalar_select %p256, %s28, 0
          %p258 = scmp.lt.s32.totalorder %s27, 0
          %s259 = scalar_select %p258, %s27, 0
          %s260 = sadd.s32 %s259, %s257
          %s261 = sadd.s32 %s260, %s255
          %s262 = smul.addr %s261, 4
          %s263 = scalar_lea.vmem %s2, %s262
        $region28: #{tpu_custom_call.1} parent=15 // pred_fallthru
          _
        // Predicated region
        $region29: #{tpu_custom_call.1} parent=15 // pred_check
          %p264 = pneg %p148
        $region30: #{tpu_custom_call.1} parent=15 // pred_check_branch
          %266 = sbr.rel (%p264) target = $region32
        $region31: #{tpu_custom_call.1} parent=15 // pred_region
          %p267 = scmp.lt.s32.totalorder %s26, 1
          %s268 = scalar_select %p267, %s26, 1
          %p269 = scmp.lt.s32.totalorder %s27, 0
          %s270 = scalar_select %p269, %s27, 0
          %s271 = sadd.s32 %s270, %s268
          %s272 = smul.addr %s271, 4
          %s273 = scalar_lea.vmem %s3, %s272
        $region32: #{tpu_custom_call.1} parent=15 // pred_fallthru
          _
      $region16: #{tpu_custom_call.1} parent=5 // pred_fallthru
        _
      %p274 = scmp.le.s32.totalorder 1, %s19
      %p275 = scmp.lt.s32.totalorder %s19, 3
      %p276 = pnand %p274, %p275
      %p277 = pneg %p276
      // Predicated region
      $region33: #{tpu_custom_call.1} parent=5 // pred_check
        _
      $region34: #{tpu_custom_call.1} parent=5 // pred_check_branch
        %279 = sbr.rel (%p276) target = $region36
      $region35: #{tpu_custom_call.1} parent=5 // pred_region
        %s280 = ssub.s32 %s19, 1
        %s281 = sand.u32 %s55, 1
        %s282 = scalar_lea.sflag [#allocation4], %s281
        %s283 = sand.u32 %s55, 1
        %s284 = smul.addr %s283, 48
        %s285 = scalar_lea.vmem [#allocation3], %s284
        // Predicated region
        $region37: #{tpu_custom_call.1} parent=35 // pred_check
          %p286 = pneg %p68
        $region38: #{tpu_custom_call.1} parent=35 // pred_check_branch
          %288 = sbr.rel (%p286) target = $region40
        $region39: #{tpu_custom_call.1} parent=35 // pred_region
          %289 = dma.done %s282, 768
        $region40: #{tpu_custom_call.1} parent=35 // pred_fallthru
          _
        %s290 = sand.u32 %s83, 1
        %s291 = scalar_lea.sflag [#allocation7], %s290
        %s292 = sand.u32 %s83, 1
        %s293 = smul.addr %s292, 48
        %s294 = scalar_lea.vmem [#allocation6], %s293
        // Predicated region
        $region41: #{tpu_custom_call.1} parent=35 // pred_check
          %p295 = pneg %p96
        $region42: #{tpu_custom_call.1} parent=35 // pred_check_branch
          %297 = sbr.rel (%p295) target = $region44
        $region43: #{tpu_custom_call.1} parent=35 // pred_region
          %298 = dma.done %s291, 768
        $region44: #{tpu_custom_call.1} parent=35 // pred_fallthru
          _
        %s299 = sand.u32 %s55, 1
        %s300 = scalar_lea.sflag [#allocation4], %s299
        %s301 = sand.u32 %s55, 1
        %s302 = smul.addr %s301, 48
        %s303 = scalar_lea.vmem [#allocation3], %s302
        %p304 = pneg %p68
        %p305 = pneg %p65
        %s306 = sand.u32 %s83, 1
        %s307 = scalar_lea.sflag [#allocation7], %s306
        %s308 = sand.u32 %s83, 1
        %s309 = smul.addr %s308, 48
        %s310 = scalar_lea.vmem [#allocation6], %s309
        %p311 = pneg %p96
        %p312 = pneg %p93
        %p313 = scmp.lt.s32.totalorder %s29, 1
        %s314 = scalar_select %p313, %s29, 1
        %p315 = scmp.lt.s32.totalorder %s31, 0
        %s316 = scalar_select %p315, %s31, 0
        %p317 = scmp.lt.s32.totalorder %s30, 0
        %s318 = scalar_select %p317, %s30, 0
        %s319 = sadd.s32 %s318, %s316
        %s320 = sadd.s32 %s319, %s314
        %s321 = smul.addr %s320, 4
        %s322 = scalar_lea.vmem %s2, %s321
        %p323 = pneg %p126
        %p324 = pneg %p123
        %p325 = scmp.lt.s32.totalorder %s29, 1
        %s326 = scalar_select %p325, %s29, 1
        %p327 = scmp.lt.s32.totalorder %s30, 0
        %s328 = scalar_select %p327, %s30, 0
        %s329 = sadd.s32 %s328, %s326
        %s330 = smul.addr %s329, 4
        %s331 = scalar_lea.vmem %s3, %s330
        %p332 = pneg %p154
        %p333 = pneg %p151
        %p334 = pneg %p184
        %p335 = pneg %p181
        %s336 = sand.u32 %s171, 1
        %s337 = scalar_lea.sflag [#allocation5], %s336
        %s338 = sand.u32 %s171, 1
        %s339 = scalar_lea.vmem [#allocation8], %s338
        %s340 = smul.u32 2, %s30
        %s341 = smul.u32 2, %s30
        %p342 = scmp.lt.s32.totalorder %s29, 1
        %s343 = scalar_select %p342, %s29, 1
        %p344 = scmp.lt.s32.totalorder %s31, 0
        %s345 = scalar_select %p344, %s31, 0
        %p346 = scmp.lt.s32.totalorder %s30, 0
        %s347 = scalar_select %p346, %s30, 0
        %s348 = sadd.s32 %s347, %s345
        %s349 = sadd.s32 %s348, %s343
        %s350 = smul.addr %s349, 4
        %s351 = scalar_lea.vmem %s2, %s350
        %p352 = scmp.lt.s32.totalorder %s29, 1
        %s353 = scalar_select %p352, %s29, 1
        %p354 = scmp.lt.s32.totalorder %s30, 0
        %s355 = scalar_select %p354, %s30, 0
        %s356 = sadd.s32 %s355, %s353
        %s357 = smul.addr %s356, 4
        %s358 = scalar_lea.vmem %s3, %s357
        %v359 = vlaneseq
        %v360 = vand.u32 %v359, 127
        %v361 = vlaneseq
        %v362 = vshrl.u32 %v361, 7
        %v363 = vadd.s32 %v362, 8
        %vm364 = vcmp.ne.s32.totalorder %v360, 0
        %vm365 = vcmp.eq.s32.totalorder %v362, 0
        %vm366 = vcmp.eq.s32.totalorder %v363, 0
        %v367 = vld [vmem:[%s285] sm:$0xff]
        %v368 = vld [vmem:[%s285 + $0x8] sm:$0xff]
        %v369 = vld [vmem:[%s294] sm:$0xff]
        %v370 = vld [vmem:[%s294 + $0x8] sm:$0xff]
        %p371 = scmp.eq.s32.totalorder %s31, 0
        // Predicated region
        $region45: #{tpu_custom_call.1} parent=35 // pred_check
          %p372 = pneg %p371
        $region46: #{tpu_custom_call.1} parent=35 // pred_check_branch
          %374 = sbr.rel (%p372) target = $region48
        $region47: #{tpu_custom_call.1} parent=35 // pred_region
          %v375 = vld [vmem:[%s358] sm:$0x1]
          %vm376 = vcmask 1047680
          %377 = vrot.lane.b32.xlu0 %v369, 16
          %v378 = vpop.permute.xlu0 %377
          %v379 = vsel %vm376, %v378, %v369
          %380 = vrot.lane.b32.xlu0 %v370, 16
          %v381 = vpop.permute.xlu0 %380
          %v382 = vsel %vm376, %v381, %v370
          %383 = vrot.lane.b32.xlu0 %v379, 16
          %v384 = vpop.permute.xlu0 %383
          %385 = vrot.lane.b32.xlu0 %v382, 16
          %v386 = vpop.permute.xlu0 %385
          %v387 = vsel %vm376, %v384, %v369
          %v388 = vsel %vm376, %v386, %v370
          %391 = vrot.lane.b32.xlu0 %v387, 113
          %v392 = vpop.permute.xlu0 %391
          %393 = vrot.lane.b32.xlu0 %v388, 113
          %v394 = vpop.permute.xlu0 %393
          %v397 = vsel %vm364, %v392, 0.0
          %v398 = vsel %vm364, %v394, 0.0
          %v399 = vrot.slane %v369, 7
          %v400 = vrot.slane %v370, 7
          %vm401 = vcmp.lt.s32.totalorder %v362, 1
          %v402 = vsel %vm401, %v399, %v400
          %v403 = vsel %vm401, %v400, %v399
          %v404 = vlaneseq
          %v405 = vshrl.u32 %v404, 7
          %v406 = vsub.s32 0, %v405
          %v407 = vrot.slane %v375, %v406
          %v408 = vsel %vm365, %v407, %v403
          %v409 = vsel %vm366, %v407, %v402
          %v410 = vsub.f32 %v397, %v369
          %v411 = vsub.f32 %v398, %v370
          %v412 = vand.u32 2147483647, %v410
          %v413 = vand.u32 2147483647, %v411
          %v414 = vsub.f32 %v408, %v369
          %v415 = vsub.f32 %v409, %v370
          %v416 = vand.u32 2147483647, %v414
          %v417 = vand.u32 2147483647, %v415
          %v418 = vadd.f32 %v412, %v416
          %v419 = vadd.f32 %v413, %v417
          %vm420 = vcmask 130048
          %421 = vst.msk [vmem:[#allocation2] sm:$0xff] %vm420, %v418
          %422 = vst.msk [vmem:[#allocation2 + $0x8] sm:$0xff] %vm420, %v419
        $region48: #{tpu_custom_call.1} parent=35 // pred_fallthru
          _
        %v423 = vld [vmem:[%s351] sm:$0x1]
        %v424 = vsub.f32 %v367, %v369
        %v425 = vsub.f32 %v368, %v370
        %v426 = vmul.f32 %v424, %v424
        %v427 = vmul.f32 %v425, %v425
        %vm428 = vcmask 1047680
        %429 = vrot.lane.b32.xlu0 %v367, 16
        %v430 = vpop.permute.xlu0 %429
        %v431 = vsel %vm428, %v430, %v367
        %432 = vrot.lane.b32.xlu0 %v368, 16
        %v433 = vpop.permute.xlu0 %432
        %v434 = vsel %vm428, %v433, %v368
        %435 = vrot.lane.b32.xlu0 %v431, 16
        %v436 = vpop.permute.xlu0 %435
        %437 = vrot.lane.b32.xlu0 %v434, 16
        %v438 = vpop.permute.xlu0 %437
        %v439 = vsel %vm428, %v436, %v367
        %v440 = vsel %vm428, %v438, %v368
        %443 = vrot.lane.b32.xlu0 %v439, 113
        %v444 = vpop.permute.xlu0 %443
        %445 = vrot.lane.b32.xlu0 %v440, 113
        %v446 = vpop.permute.xlu0 %445
        %v449 = vsel %vm364, %v444, 0.0
        %v450 = vsel %vm364, %v446, 0.0
        %v451 = vrot.slane %v367, 7
        %v452 = vrot.slane %v368, 7
        %vm453 = vcmp.lt.s32.totalorder %v362, 1
        %v454 = vsel %vm453, %v451, %v452
        %v455 = vsel %vm453, %v452, %v451
        %v456 = vlaneseq
        %v457 = vshrl.u32 %v456, 7
        %v458 = vsub.s32 0, %v457
        %v459 = vrot.slane %v423, %v458
        %v460 = vsel %vm365, %v459, %v455
        %v461 = vsel %vm366, %v459, %v454
        %v462 = vsub.f32 %v449, %v367
        %v463 = vsub.f32 %v450, %v368
        %v464 = vand.u32 2147483647, %v462
        %v465 = vand.u32 2147483647, %v463
        %v466 = vsub.f32 %v460, %v367
        %v467 = vsub.f32 %v461, %v368
        %v468 = vand.u32 2147483647, %v466
        %v469 = vand.u32 2147483647, %v467
        %v470 = vadd.f32 %v464, %v468
        %v471 = vadd.f32 %v465, %v469
        %v472 = vld [vmem:[#allocation2] sm:$0xff]
        %v473 = vld [vmem:[#allocation2 + $0x8] sm:$0xff]
        %v474 = vsub.f32 %v470, %v472
        %v475 = vsub.f32 %v471, %v473
        %v476 = vand.u32 2147483647, %v474
        %v477 = vand.u32 2147483647, %v475
        %v478 = vadd.f32 %v426, %v476
        %v479 = vadd.f32 %v427, %v477
        %vm480 = vcmask 130048
        %v481 = vsel %vm480, %v478, 0.0
        %v482 = vsel %vm480, %v479, 0.0
        %v483 = vadd.f32 %v481, %v482
        %v484 = vrot.slane %v483, 4
        %v485 = vadd.f32 %v483, %v484
        %v486 = vrot.slane %v485, 2
        %v487 = vadd.f32 %v485, %v486
        %v488 = vrot.slane %v487, 1
        %v489 = vadd.f32 %v487, %v488
        %v490 = vadd.f32 %v489, 0.0
        %s491 = scalar_lea.vmem %s285, 16 [#allocation3]
        %v492 = vld [vmem:[%s491] sm:$0xff]
        %v493 = vld [vmem:[%s491 + $0x8] sm:$0xff]
        %s494 = scalar_lea.vmem %s294, 16 [#allocation6]
        %v495 = vld [vmem:[%s494] sm:$0xff]
        %v496 = vld [vmem:[%s494 + $0x8] sm:$0xff]
        // Predicated region
        $region49: #{tpu_custom_call.1} parent=35 // pred_check
          %p497 = pneg %p371
        $region50: #{tpu_custom_call.1} parent=35 // pred_check_branch
          %499 = sbr.rel (%p497) target = $region52
        $region51: #{tpu_custom_call.1} parent=35 // pred_region
          %v500 = vld [vmem:[%s358 + $0x1] sm:$0x1]
          %501 = vrot.lane.b32.xlu0 %v495, 16
          %v502 = vpop.permute.xlu0 %501
          %v503 = vsel %vm428, %v502, %v495
          %504 = vrot.lane.b32.xlu0 %v496, 16
          %v505 = vpop.permute.xlu0 %504
          %v506 = vsel %vm428, %v505, %v496
          %507 = vrot.lane.b32.xlu0 %v503, 16
          %v508 = vpop.permute.xlu0 %507
          %509 = vrot.lane.b32.xlu0 %v506, 16
          %v510 = vpop.permute.xlu0 %509
          %v511 = vsel %vm428, %v508, %v495
          %v512 = vsel %vm428, %v510, %v496
          %515 = vrot.lane.b32.xlu0 %v511, 113
          %v516 = vpop.permute.xlu0 %515
          %517 = vrot.lane.b32.xlu0 %v512, 113
          %v518 = vpop.permute.xlu0 %517
          %v521 = vsel %vm364, %v516, 0.0
          %v522 = vsel %vm364, %v518, 0.0
          %v523 = vrot.slane %v495, 7
          %v524 = vrot.slane %v496, 7
          %v525 = vsel %vm453, %v523, %v524
          %v526 = vsel %vm453, %v524, %v523
          %v527 = vlaneseq
          %v528 = vshrl.u32 %v527, 7
          %v529 = vsub.s32 0, %v528
          %v530 = vrot.slane %v500, %v529
          %v531 = vsel %vm365, %v530, %v526
          %v532 = vsel %vm366, %v530, %v525
          %v533 = vsub.f32 %v521, %v495
          %v534 = vsub.f32 %v522, %v496
          %v535 = vand.u32 2147483647, %v533
          %v536 = vand.u32 2147483647, %v534
          %v537 = vsub.f32 %v531, %v495
          %v538 = vsub.f32 %v532, %v496
          %v539 = vand.u32 2147483647, %v537
          %v540 = vand.u32 2147483647, %v538
          %v541 = vadd.f32 %v535, %v539
          %v542 = vadd.f32 %v536, %v540
          %s543 = scalar_lea.vmem [#allocation2], 16
          %544 = vst.msk [vmem:[%s543] sm:$0xff] %vm480, %v541
          %545 = vst.msk [vmem:[%s543 + $0x8] sm:$0xff] %vm480, %v542
        $region52: #{tpu_custom_call.1} parent=35 // pred_fallthru
          _
        %v546 = vld [vmem:[%s351 + $0x1] sm:$0x1]
        %v547 = vsub.f32 %v492, %v495
        %v548 = vsub.f32 %v493, %v496
        %v549 = vmul.f32 %v547, %v547
        %v550 = vmul.f32 %v548, %v548
        %551 = vrot.lane.b32.xlu0 %v492, 16
        %v552 = vpop.permute.xlu0 %551
        %v553 = vsel %vm428, %v552, %v492
        %554 = vrot.lane.b32.xlu0 %v493, 16
        %v555 = vpop.permute.xlu0 %554
        %v556 = vsel %vm428, %v555, %v493
        %557 = vrot.lane.b32.xlu0 %v553, 16
        %v558 = vpop.permute.xlu0 %557
        %559 = vrot.lane.b32.xlu0 %v556, 16
        %v560 = vpop.permute.xlu0 %559
        %v561 = vsel %vm428, %v558, %v492
        %v562 = vsel %vm428, %v560, %v493
        %565 = vrot.lane.b32.xlu0 %v561, 113
        %v566 = vpop.permute.xlu0 %565
        %567 = vrot.lane.b32.xlu0 %v562, 113
        %v568 = vpop.permute.xlu0 %567
        %v571 = vsel %vm364, %v566, 0.0
        %v572 = vsel %vm364, %v568, 0.0
        %v573 = vrot.slane %v492, 7
        %v574 = vrot.slane %v493, 7
        %v575 = vsel %vm453, %v573, %v574
        %v576 = vsel %vm453, %v574, %v573
        %v577 = vlaneseq
        %v578 = vshrl.u32 %v577, 7
        %v579 = vsub.s32 0, %v578
        %v580 = vrot.slane %v546, %v579
        %v581 = vsel %vm365, %v580, %v576
        %v582 = vsel %vm366, %v580, %v575
        %v583 = vsub.f32 %v571, %v492
        %v584 = vsub.f32 %v572, %v493
        %v585 = vand.u32 2147483647, %v583
        %v586 = vand.u32 2147483647, %v584
        %v587 = vsub.f32 %v581, %v492
        %v588 = vsub.f32 %v582, %v493
        %v589 = vand.u32 2147483647, %v587
        %v590 = vand.u32 2147483647, %v588
        %v591 = vadd.f32 %v585, %v589
        %v592 = vadd.f32 %v586, %v590
        %s593 = scalar_lea.vmem [#allocation2], 16
        %v594 = vld [vmem:[%s593] sm:$0xff]
        %v595 = vld [vmem:[%s593 + $0x8] sm:$0xff]
        %v596 = vsub.f32 %v591, %v594
        %v597 = vsub.f32 %v592, %v595
        %v598 = vand.u32 2147483647, %v596
        %v599 = vand.u32 2147483647, %v597
        %v600 = vadd.f32 %v549, %v598
        %v601 = vadd.f32 %v550, %v599
        %v602 = vsel %vm480, %v600, 0.0
        %v603 = vsel %vm480, %v601, 0.0
        %v604 = vadd.f32 %v602, %v603
        %v605 = vrot.slane %v604, 4
        %v606 = vadd.f32 %v604, %v605
        %v607 = vrot.slane %v606, 2
        %v608 = vadd.f32 %v606, %v607
        %v609 = vrot.slane %v608, 1
        %v610 = vadd.f32 %v608, %v609
        %v611 = vadd.f32 %v490, %v610
        %s612 = scalar_lea.vmem %s285, 32 [#allocation3]
        %v613 = vld [vmem:[%s612] sm:$0xff]
        %v614 = vld [vmem:[%s612 + $0x8] sm:$0xff]
        %s615 = scalar_lea.vmem %s294, 32 [#allocation6]
        %v616 = vld [vmem:[%s615] sm:$0xff]
        %v617 = vld [vmem:[%s615 + $0x8] sm:$0xff]
        // Predicated region
        $region53: #{tpu_custom_call.1} parent=35 // pred_check
          %p618 = pneg %p371
        $region54: #{tpu_custom_call.1} parent=35 // pred_check_branch
          %620 = sbr.rel (%p618) target = $region56
        $region55: #{tpu_custom_call.1} parent=35 // pred_region
          %v621 = vld [vmem:[%s358 + $0x2] sm:$0x1]
          %622 = vrot.lane.b32.xlu0 %v616, 16
          %v623 = vpop.permute.xlu0 %622
          %v624 = vsel %vm428, %v623, %v616
          %625 = vrot.lane.b32.xlu0 %v617, 16
          %v626 = vpop.permute.xlu0 %625
          %v627 = vsel %vm428, %v626, %v617
          %628 = vrot.lane.b32.xlu0 %v624, 16
          %v629 = vpop.permute.xlu0 %628
          %630 = vrot.lane.b32.xlu0 %v627, 16
          %v631 = vpop.permute.xlu0 %630
          %v632 = vsel %vm428, %v629, %v616
          %v633 = vsel %vm428, %v631, %v617
          %636 = vrot.lane.b32.xlu0 %v632, 113
          %v637 = vpop.permute.xlu0 %636
          %638 = vrot.lane.b32.xlu0 %v633, 113
          %v639 = vpop.permute.xlu0 %638
          %v642 = vsel %vm364, %v637, 0.0
          %v643 = vsel %vm364, %v639, 0.0
          %v644 = vrot.slane %v616, 7
          %v645 = vrot.slane %v617, 7
          %v646 = vsel %vm453, %v644, %v645
          %v647 = vsel %vm453, %v645, %v644
          %v648 = vlaneseq
          %v649 = vshrl.u32 %v648, 7
          %v650 = vsub.s32 0, %v649
          %v651 = vrot.slane %v621, %v650
          %v652 = vsel %vm365, %v651, %v647
          %v653 = vsel %vm366, %v651, %v646
          %v654 = vsub.f32 %v642, %v616
          %v655 = vsub.f32 %v643, %v617
          %v656 = vand.u32 2147483647, %v654
          %v657 = vand.u32 2147483647, %v655
          %v658 = vsub.f32 %v652, %v616
          %v659 = vsub.f32 %v653, %v617
          %v660 = vand.u32 2147483647, %v658
          %v661 = vand.u32 2147483647, %v659
          %v662 = vadd.f32 %v656, %v660
          %v663 = vadd.f32 %v657, %v661
          %s664 = scalar_lea.vmem [#allocation2], 32
          %665 = vst.msk [vmem:[%s664] sm:$0xff] %vm480, %v662
          %666 = vst.msk [vmem:[%s664 + $0x8] sm:$0xff] %vm480, %v663
        $region56: #{tpu_custom_call.1} parent=35 // pred_fallthru
          _
        %v667 = vld [vmem:[%s351 + $0x2] sm:$0x1]
        %v668 = vsub.f32 %v613, %v616
        %v669 = vsub.f32 %v614, %v617
        %v670 = vmul.f32 %v668, %v668
        %v671 = vmul.f32 %v669, %v669
        %672 = vrot.lane.b32.xlu0 %v613, 16
        %v673 = vpop.permute.xlu0 %672
        %v674 = vsel %vm428, %v673, %v613
        %675 = vrot.lane.b32.xlu0 %v614, 16
        %v676 = vpop.permute.xlu0 %675
        %v677 = vsel %vm428, %v676, %v614
        %678 = vrot.lane.b32.xlu0 %v674, 16
        %v679 = vpop.permute.xlu0 %678
        %680 = vrot.lane.b32.xlu0 %v677, 16
        %v681 = vpop.permute.xlu0 %680
        %v682 = vsel %vm428, %v679, %v613
        %v683 = vsel %vm428, %v681, %v614
        %686 = vrot.lane.b32.xlu0 %v682, 113
        %v687 = vpop.permute.xlu0 %686
        %688 = vrot.lane.b32.xlu0 %v683, 113
        %v689 = vpop.permute.xlu0 %688
        %v692 = vsel %vm364, %v687, 0.0
        %v693 = vsel %vm364, %v689, 0.0
        %v694 = vrot.slane %v613, 7
        %v695 = vrot.slane %v614, 7
        %v696 = vsel %vm453, %v694, %v695
        %v697 = vsel %vm453, %v695, %v694
        %v698 = vlaneseq
        %v699 = vshrl.u32 %v698, 7
        %v700 = vsub.s32 0, %v699
        %v701 = vrot.slane %v667, %v700
        %v702 = vsel %vm365, %v701, %v697
        %v703 = vsel %vm366, %v701, %v696
        %v704 = vsub.f32 %v692, %v613
        %v705 = vsub.f32 %v693, %v614
        %v706 = vand.u32 2147483647, %v704
        %v707 = vand.u32 2147483647, %v705
        %v708 = vsub.f32 %v702, %v613
        %v709 = vsub.f32 %v703, %v614
        %v710 = vand.u32 2147483647, %v708
        %v711 = vand.u32 2147483647, %v709
        %v712 = vadd.f32 %v706, %v710
        %v713 = vadd.f32 %v707, %v711
        %s714 = scalar_lea.vmem [#allocation2], 32
        %v715 = vld [vmem:[%s714] sm:$0xff]
        %v716 = vld [vmem:[%s714 + $0x8] sm:$0xff]
        %v717 = vsub.f32 %v712, %v715
        %v718 = vsub.f32 %v713, %v716
        %v719 = vand.u32 2147483647, %v717
        %v720 = vand.u32 2147483647, %v718
        %v721 = vadd.f32 %v670, %v719
        %v722 = vadd.f32 %v671, %v720
        %v723 = vsel %vm480, %v721, 0.0
        %v724 = vsel %vm480, %v722, 0.0
        %v725 = vadd.f32 %v723, %v724
        %v726 = vrot.slane %v725, 4
        %v727 = vadd.f32 %v725, %v726
        %v728 = vrot.slane %v727, 2
        %v729 = vadd.f32 %v727, %v728
        %v730 = vrot.slane %v729, 1
        %v731 = vadd.f32 %v729, %v730
        %v732 = vadd.f32 %v611, %v731
        %vm733 = vcmask 122880
        %734 = vst.msk [vmem:[%s339] sm:$0x1] %vm733, %v732
        %s735 = sand.u32 %s171, 1
        %s736 = scalar_lea.sflag [#allocation5], %s735
        %s737 = sand.u32 %s171, 1
        %s738 = scalar_lea.vmem [#allocation8], %s737
        // Predicated region
        $region57: #{tpu_custom_call.1} parent=35 // pred_check
          %p739 = pneg %p181
        $region58: #{tpu_custom_call.1} parent=35 // pred_check_branch
          %741 = sbr.rel (%p739) target = $region60
        $region59: #{tpu_custom_call.1} parent=35 // pred_region
          %s743 = ssub.s32 16, 16
          %744 = vsyncadd %s736, %s743
          %s745 = sadd.s32 %s31, %s30
          %s746 = sadd.s32 %s745, %s29
          %s747 = smul.addr %s746, 16
          %s748 = scalar_lea.hbm %s4, %s747
          %s750 = sshll.u32 %s738, 4
          %s751 = int_to_ptr.vmem [resolvable:$true] %s750
          %753 = dma.vmem_to_hbm [thread:$0]  %s751, 16, %s748, %s736
        $region60: #{tpu_custom_call.1} parent=35 // pred_fallthru
          _
      $region36: #{tpu_custom_call.1} parent=5 // pred_fallthru
        _
      %p754 = scmp.le.s32.totalorder 2, %s19
      // Predicated region
      $region61: #{tpu_custom_call.1} parent=5 // pred_check
        %p755 = pneg %p754
      $region62: #{tpu_custom_call.1} parent=5 // pred_check_branch
        %757 = sbr.rel (%p755) target = $region64
      $region63: #{tpu_custom_call.1} parent=5 // pred_region
        %s758 = ssub.s32 %s19, 2
        // Predicated region
        $region65: #{tpu_custom_call.1} parent=63 // pred_check
          %p759 = pneg %p187
        $region66: #{tpu_custom_call.1} parent=63 // pred_check_branch
          %761 = sbr.rel (%p759) target = $region68
        $region67: #{tpu_custom_call.1} parent=63 // pred_region
          %s762 = sand.u32 %s172, 1
          %s763 = scalar_lea.sflag [#allocation5], %s762
          %s764 = sand.u32 %s172, 1
          %s765 = scalar_lea.vmem [#allocation8], %s764
          %766 = dma.done %s763, 16
        $region68: #{tpu_custom_call.1} parent=63 // pred_fallthru
          _
      $region64: #{tpu_custom_call.1} parent=5 // pred_fallthru
        _
    $region6: #{tpu_custom_call.1} parent=1 // loop_footer
      %s23 = sadd.s32 1, %s19
    $region7: #{tpu_custom_call.1} parent=1 // loop_footer_branch
      %18 = sbr.rel target = $region3
    $region8: #{tpu_custom_call.1} parent=1 // loop_exit
      _
    %767 = vsyncpa [#allocation4], 1
    %s768 = scalar_lea.sflag [#allocation4], 1
    %769 = vsyncpa %s768, 1
    %770 = vsyncpa [#allocation7], 1
    %s771 = scalar_lea.sflag [#allocation7], 1
    %772 = vsyncpa %s771, 1
    %773 = vsyncpa [#allocation5], 1
    %s774 = scalar_lea.sflag [#allocation5], 1
    %775 = vsyncpa %s774, 1

</llo_original>
